<compile_context>
chip_gen: v7x
topology: tpu7x:2x2x1
jax: 0.10.0
libtpu: 0.0.40
codegen_flags: <defaults>
</compile_context>

<pallas_src>
import functools

import jax
import jax.numpy as jnp
from jax import lax
from jax.experimental import pallas as pl
from jax.experimental.pallas import tpu as pltpu


def _conv_relu_kernel(x_ref, w_ref, o_ref, p_ref, *,
                      kh, kw, cin, wp, wo, ho, m_slab):
    """One grid step == one full image.

    x_ref: (1, Cin, Lp)      flattened zero-padded image (row-major spatial)
    w_ref: (Cout, K)         K = kh*kw*cin, K ordered as (kh, kw, cin)
    o_ref: (1, Cout, Ho*Wo)  lane-major flattened output
    p_ref: (K, m_slab)       VMEM scratch: im2col patch slab
    """
    # ---- in-kernel im2col ---------------------------------------------------
    # With stride 1, the tap (i, j) value for the flattened output position
    # p = oh*Wp + ow is x_flat[c, p + i*Wp + j]; i.e. every tap row of the slab
    # is a single contiguous slice of the flattened image.  Columns whose
    # (p mod Wp) >= Wo are row-seam junk and are dropped in the compaction.
    for i in range(kh):
        for j in range(kw):
            t = i * kw + j
            off = i * wp + j
            p_ref[t * cin:(t + 1) * cin, :] = x_ref[0, :, off:off + m_slab]

    # ---- single fused MXU matmul + ReLU --------------------------------------
    acc = jnp.dot(w_ref[...], p_ref[...], preferred_element_type=jnp.float32)
    acc = jnp.maximum(acc, 0.0)            # ReLU on the f32 accumulator

    # ---- compact away the (Wp - Wo) junk columns at each row seam ------------
    if wo == wp:                            # e.g. 1x1 convs: nothing to drop
        o_ref[0, :, :] = acc[:, :ho * wo].astype(o_ref.dtype)
    else:
        for oh in range(ho):
            o_ref[0, :, oh * wo:(oh + 1) * wo] = (
                acc[:, oh * wp:oh * wp + wo].astype(o_ref.dtype))


def conv_relu_pallas(x_nchw, w_oihw, *, stride=1, padding=0,
                     compute_dtype=jnp.bfloat16):
    """Equivalent of conv_relu.forward: relu(conv2d(x, w, bias=None))."""
    n, cin, h, w = x_nchw.shape
    cout, cin_w, kh, kw = w_oihw.shape
    assert cin == cin_w
    # TODO(synk): support stride > 1, dilation and groups from the generic
    # Conv2d kwargs; the in-kernel im2col below assumes stride == 1.
    assert stride == 1, "Pallas conv_relu currently supports stride=1 only"

    out_dtype = x_nchw.dtype
    if compute_dtype is None:
        compute_dtype = x_nchw.dtype

    hp, wp = h + 2 * padding, w + 2 * padding
    ho, wo = hp - kh + 1, wp - kw + 1
    m = ho * wo                        # valid output positions per image
    k_dim = kh * kw * cin

    # Patch-slab width: last valid column index is (ho-1)*wp + wo - 1; round the
    # slab up to a lane-dense multiple of 128 (the extra tail is discarded).
    m_over = (ho - 1) * wp + wo
    m_slab = pl.cdiv(m_over, 128) * 128

    # The deepest tap slice ends at (kh-1)*wp + (kw-1) + m_slab; pad the image
    # with extra zero rows at the bottom so every static slice stays in bounds.
    l_needed = (kh - 1) * wp + (kw - 1) + m_slab
    extra_rows = pl.cdiv(max(l_needed - hp * wp, 0), wp)
    lp = (hp + extra_rows) * wp

    # One cast + one fused pad (spatial zero padding + bottom slack rows) and a
    # free reshape; the kernel then reads x from HBM exactly once.
    x_pad = jnp.pad(
        x_nchw.astype(compute_dtype),
        ((0, 0), (0, 0), (padding, padding + extra_rows), (padding, padding)))
    x_flat = x_pad.reshape(n, cin, lp)

    # OIHW -> (Cout, K) with K ordered (kh, kw, cin) to match the patch slab.
    w_mat = jnp.transpose(w_oihw, (0, 2, 3, 1)).reshape(cout, k_dim)
    w_mat = w_mat.astype(compute_dtype)

    kernel = functools.partial(
        _conv_relu_kernel, kh=kh, kw=kw, cin=cin, wp=wp, wo=wo, ho=ho,
        m_slab=m_slab)

    # TODO(synk): row-tile very large images (keep the patch scratch in VMEM)
    # instead of one whole-image grid step.
    out_flat = pl.pallas_call(
        kernel,
        out_shape=jax.ShapeDtypeStruct((n, cout, m), out_dtype),
        grid_spec=pltpu.PrefetchScalarGridSpec(
            num_scalar_prefetch=0,
            grid=(n,),
            in_specs=[
                pl.BlockSpec((1, cin, lp), lambda b: (b, 0, 0)),
                # Constant index_map: the tiny weight block is copied once and
                # stays resident across the whole grid.
                pl.BlockSpec((cout, k_dim), lambda b: (0, 0)),
            ],
            out_specs=pl.BlockSpec((1, cout, m), lambda b: (b, 0, 0)),
            scratch_shapes=[pltpu.VMEM((k_dim, m_slab), compute_dtype)],
        ),
        compiler_params=pltpu.CompilerParams(
            # Fat whole-image steps amortise per-step overhead on v5e/v6e;
            # "parallel" lets v7x's two TensorCores split the batch.
            dimension_semantics=("parallel",),
            # v7x has 64 MiB VMEM per TensorCore; stay comfortably below it.
            vmem_limit_bytes=48 * 1024 * 1024,
        ),
    )(x_flat, w_mat)

    # (N, Cout, Ho*Wo) reshapes straight back to NCHW: no slice, no transpose.
    return out_flat.reshape(n, cout, ho, wo)


if __name__ == "__main__":
    key = jax.random.PRNGKey(0)
    kx, kw_ = jax.random.split(key)

    # Shapes consistent with conv_relu(4, 8, kernel_size=3, padding=1).
    N, CIN, COUT, H, W, KH, KW, PAD = 2, 4, 8, 16, 16, 3, 3, 1

    x = jax.random.normal(kx, (N, CIN, H, W), dtype=jnp.float32)              # NCHW
    w = jax.random.normal(kw_, (COUT, CIN, KH, KW), dtype=jnp.float32) * 0.1  # OIHW

    # Reference: XLA conv + relu (same semantics as F.relu(nn.Conv2d(...)(x))).
    ref = lax.conv_general_dilated(
        x, w, window_strides=(1, 1), padding=((PAD, PAD), (PAD, PAD)),
        dimension_numbers=("NCHW", "OIHW", "NCHW"))
    ref = jnp.maximum(ref, 0.0)

    # Default path: bf16 streaming, f32 accumulate (loose tol: bf16 rounding).
    out_bf16 = jax.block_until_ready(conv_relu_pallas(x, w, padding=PAD))
    assert out_bf16.shape == ref.shape
    assert jnp.allclose(out_bf16, ref, atol=2.5e-2, rtol=2.5e-2), \
        "bf16 kernel mismatch vs reference conv"

    # f32 compute path: tight check of the im2col / compaction layout logic.
    out_f32 = jax.block_until_ready(
        conv_relu_pallas(x, w, padding=PAD, compute_dtype=jnp.float32))
    assert jnp.allclose(out_f32, ref, atol=1e-3, rtol=1e-3), \
        "f32 kernel mismatch vs reference conv"

    print("KERNEL_OK")
</pallas_src>

<mosaic_0001>
module attributes {stable_mosaic.version = 11 : i64} {
  func.func @_conv_relu_kernel(%arg0: i32, %arg1: memref<1x4x432xbf16, #tpu.memory_space<vmem>>, %arg2: memref<8x36xbf16, #tpu.memory_space<vmem>>, %arg3: memref<1x8x256xf32, #tpu.memory_space<vmem>>, %arg4: memref<36x384xbf16, #tpu.memory_space<vmem>>) attributes {dimension_semantics = [#tpu.dimension_semantics<parallel>], iteration_bounds = array<i64: 2>, scalar_prefetch = 0 : i64, scratch_operands = 1 : i64, tpu.core_type = #tpu.core_type<tc>, window_params = [{transform_indices = @transform_0, window_bounds = array<i64: 1, 4, 432>}, {pipeline_mode = #tpu.pipeline_mode<synchronous>, transform_indices = @transform_1, window_bounds = array<i64: 8, 36>}, {transform_indices = @transform_2, window_bounds = array<i64: 1, 8, 256>}]} {
    %c0 = arith.constant 0 : index
    %c0_0 = arith.constant 0 : index
    %c0_1 = arith.constant 0 : index
    %0 = vector.load %arg1[%c0, %c0_0, %c0_1] : memref<1x4x432xbf16, #tpu.memory_space<vmem>>, vector<1x4x384xbf16>
    %1 = vector.shape_cast %0 : vector<1x4x384xbf16> to vector<4x384xbf16>
    %c0_2 = arith.constant 0 : index
    %c0_3 = arith.constant 0 : index
    %2 = vector.load %arg4[%c0_2, %c0_3] : memref<36x384xbf16, #tpu.memory_space<vmem>>, vector<4x384xbf16>
    tpu.vector_store %arg4[%c0_2, %c0_3], %1 {strides = array<i32>} : memref<36x384xbf16, #tpu.memory_space<vmem>>, vector<4x384xbf16>,
    %c0_4 = arith.constant 0 : index
    %c0_5 = arith.constant 0 : index
    %c1 = arith.constant 1 : index
    %3 = vector.load %arg1[%c0_4, %c0_5, %c1] : memref<1x4x432xbf16, #tpu.memory_space<vmem>>, vector<1x4x384xbf16>
    %4 = vector.shape_cast %3 : vector<1x4x384xbf16> to vector<4x384xbf16>
    %c4 = arith.constant 4 : index
    %c0_6 = arith.constant 0 : index
    %5 = vector.load %arg4[%c4, %c0_6] : memref<36x384xbf16, #tpu.memory_space<vmem>>, vector<4x384xbf16>
    tpu.vector_store %arg4[%c4, %c0_6], %4 {strides = array<i32>} : memref<36x384xbf16, #tpu.memory_space<vmem>>, vector<4x384xbf16>,
    %c0_7 = arith.constant 0 : index
    %c0_8 = arith.constant 0 : index
    %c2 = arith.constant 2 : index
    %6 = vector.load %arg1[%c0_7, %c0_8, %c2] : memref<1x4x432xbf16, #tpu.memory_space<vmem>>, vector<1x4x384xbf16>
    %7 = vector.shape_cast %6 : vector<1x4x384xbf16> to vector<4x384xbf16>
    %c8 = arith.constant 8 : index
    %c0_9 = arith.constant 0 : index
    %8 = vector.load %arg4[%c8, %c0_9] : memref<36x384xbf16, #tpu.memory_space<vmem>>, vector<4x384xbf16>
    tpu.vector_store %arg4[%c8, %c0_9], %7 {strides = array<i32>} : memref<36x384xbf16, #tpu.memory_space<vmem>>, vector<4x384xbf16>,
    %c0_10 = arith.constant 0 : index
    %c0_11 = arith.constant 0 : index
    %c18 = arith.constant 18 : index
    %9 = vector.load %arg1[%c0_10, %c0_11, %c18] : memref<1x4x432xbf16, #tpu.memory_space<vmem>>, vector<1x4x384xbf16>
    %10 = vector.shape_cast %9 : vector<1x4x384xbf16> to vector<4x384xbf16>
    %c12 = arith.constant 12 : index
    %c0_12 = arith.constant 0 : index
    %11 = vector.load %arg4[%c12, %c0_12] : memref<36x384xbf16, #tpu.memory_space<vmem>>, vector<4x384xbf16>
    tpu.vector_store %arg4[%c12, %c0_12], %10 {strides = array<i32>} : memref<36x384xbf16, #tpu.memory_space<vmem>>, vector<4x384xbf16>,
    %c0_13 = arith.constant 0 : index
    %c0_14 = arith.constant 0 : index
    %c19 = arith.constant 19 : index
    %12 = vector.load %arg1[%c0_13, %c0_14, %c19] : memref<1x4x432xbf16, #tpu.memory_space<vmem>>, vector<1x4x384xbf16>
    %13 = vector.shape_cast %12 : vector<1x4x384xbf16> to vector<4x384xbf16>
    %c16 = arith.constant 16 : index
    %c0_15 = arith.constant 0 : index
    %14 = vector.load %arg4[%c16, %c0_15] : memref<36x384xbf16, #tpu.memory_space<vmem>>, vector<4x384xbf16>
    tpu.vector_store %arg4[%c16, %c0_15], %13 {strides = array<i32>} : memref<36x384xbf16, #tpu.memory_space<vmem>>, vector<4x384xbf16>,
    %c0_16 = arith.constant 0 : index
    %c0_17 = arith.constant 0 : index
    %c20 = arith.constant 20 : index
    %15 = vector.load %arg1[%c0_16, %c0_17, %c20] : memref<1x4x432xbf16, #tpu.memory_space<vmem>>, vector<1x4x384xbf16>
    %16 = vector.shape_cast %15 : vector<1x4x384xbf16> to vector<4x384xbf16>
    %c20_18 = arith.constant 20 : index
    %c0_19 = arith.constant 0 : index
    %17 = vector.load %arg4[%c20_18, %c0_19] : memref<36x384xbf16, #tpu.memory_space<vmem>>, vector<4x384xbf16>
    tpu.vector_store %arg4[%c20_18, %c0_19], %16 {strides = array<i32>} : memref<36x384xbf16, #tpu.memory_space<vmem>>, vector<4x384xbf16>,
    %c0_20 = arith.constant 0 : index
    %c0_21 = arith.constant 0 : index
    %c36 = arith.constant 36 : index
    %18 = vector.load %arg1[%c0_20, %c0_21, %c36] : memref<1x4x432xbf16, #tpu.memory_space<vmem>>, vector<1x4x384xbf16>
    %19 = vector.shape_cast %18 : vector<1x4x384xbf16> to vector<4x384xbf16>
    %c24 = arith.constant 24 : index
    %c0_22 = arith.constant 0 : index
    %20 = vector.load %arg4[%c24, %c0_22] : memref<36x384xbf16, #tpu.memory_space<vmem>>, vector<4x384xbf16>
    tpu.vector_store %arg4[%c24, %c0_22], %19 {strides = array<i32>} : memref<36x384xbf16, #tpu.memory_space<vmem>>, vector<4x384xbf16>,
    %c0_23 = arith.constant 0 : index
    %c0_24 = arith.constant 0 : index
    %c37 = arith.constant 37 : index
    %21 = vector.load %arg1[%c0_23, %c0_24, %c37] : memref<1x4x432xbf16, #tpu.memory_space<vmem>>, vector<1x4x384xbf16>
    %22 = vector.shape_cast %21 : vector<1x4x384xbf16> to vector<4x384xbf16>
    %c28 = arith.constant 28 : index
    %c0_25 = arith.constant 0 : index
    %23 = vector.load %arg4[%c28, %c0_25] : memref<36x384xbf16, #tpu.memory_space<vmem>>, vector<4x384xbf16>
    tpu.vector_store %arg4[%c28, %c0_25], %22 {strides = array<i32>} : memref<36x384xbf16, #tpu.memory_space<vmem>>, vector<4x384xbf16>,
    %c0_26 = arith.constant 0 : index
    %c0_27 = arith.constant 0 : index
    %c38 = arith.constant 38 : index
    %24 = vector.load %arg1[%c0_26, %c0_27, %c38] : memref<1x4x432xbf16, #tpu.memory_space<vmem>>, vector<1x4x384xbf16>
    %25 = vector.shape_cast %24 : vector<1x4x384xbf16> to vector<4x384xbf16>
    %c32 = arith.constant 32 : index
    %c0_28 = arith.constant 0 : index
    %26 = vector.load %arg4[%c32, %c0_28] : memref<36x384xbf16, #tpu.memory_space<vmem>>, vector<4x384xbf16>
    tpu.vector_store %arg4[%c32, %c0_28], %25 {strides = array<i32>} : memref<36x384xbf16, #tpu.memory_space<vmem>>, vector<4x384xbf16>,
    %c0_29 = arith.constant 0 : index
    %c0_30 = arith.constant 0 : index
    %27 = vector.load %arg2[%c0_29, %c0_30] : memref<8x36xbf16, #tpu.memory_space<vmem>>, vector<8x36xbf16>
    %c0_31 = arith.constant 0 : index
    %c0_32 = arith.constant 0 : index
    %28 = vector.load %arg4[%c0_31, %c0_32] : memref<36x384xbf16, #tpu.memory_space<vmem>>, vector<36x384xbf16>
    %cst = arith.constant dense<0.000000e+00> : vector<8x384xf32>
    %29 = tpu.matmul %27, %28, %cst {dimension_numbers = #tpu.dot_dimension_numbers<[1], [0], [0], [1], [0, 0, 1, 1], [], []>} : vector<8x36xbf16>, vector<36x384xbf16>, vector<8x384xf32> -> vector<8x384xf32>
    %cst_33 = arith.constant 0.000000e+00 : f32
    %30 = vector.broadcast %cst_33 : f32 to vector<8x384xf32>
    %31 = arith.maximumf %29, %30 : vector<8x384xf32>
    %32 = vector.extract_strided_slice %31 {offsets = [0, 0], sizes = [8, 16], strides = [1, 1]} : vector<8x384xf32> to vector<8x16xf32>
    %c0_34 = arith.constant 0 : index
    %c0_35 = arith.constant 0 : index
    %c0_36 = arith.constant 0 : index
    %33 = vector.load %arg3[%c0_34, %c0_35, %c0_36] : memref<1x8x256xf32, #tpu.memory_space<vmem>>, vector<1x8x16xf32>
    %34 = vector.shape_cast %33 : vector<1x8x16xf32> to vector<8x16xf32>
    %35 = vector.shape_cast %32 : vector<8x16xf32> to vector<1x8x16xf32>
    tpu.vector_store %arg3[%c0_34, %c0_35, %c0_36], %35 {strides = array<i32>} : memref<1x8x256xf32, #tpu.memory_space<vmem>>, vector<1x8x16xf32>,
    %36 = vector.extract_strided_slice %31 {offsets = [0, 18], sizes = [8, 16], strides = [1, 1]} : vector<8x384xf32> to vector<8x16xf32>
    %c0_37 = arith.constant 0 : index
    %c0_38 = arith.constant 0 : index
    %c16_39 = arith.constant 16 : index
    %37 = vector.load %arg3[%c0_37, %c0_38, %c16_39] : memref<1x8x256xf32, #tpu.memory_space<vmem>>, vector<1x8x16xf32>
    %38 = vector.shape_cast %37 : vector<1x8x16xf32> to vector<8x16xf32>
    %39 = vector.shape_cast %36 : vector<8x16xf32> to vector<1x8x16xf32>
    tpu.vector_store %arg3[%c0_37, %c0_38, %c16_39], %39 {strides = array<i32>} : memref<1x8x256xf32, #tpu.memory_space<vmem>>, vector<1x8x16xf32>,
    %40 = vector.extract_strided_slice %31 {offsets = [0, 36], sizes = [8, 16], strides = [1, 1]} : vector<8x384xf32> to vector<8x16xf32>
    %c0_40 = arith.constant 0 : index
    %c0_41 = arith.constant 0 : index
    %c32_42 = arith.constant 32 : index
    %41 = vector.load %arg3[%c0_40, %c0_41, %c32_42] : memref<1x8x256xf32, #tpu.memory_space<vmem>>, vector<1x8x16xf32>
    %42 = vector.shape_cast %41 : vector<1x8x16xf32> to vector<8x16xf32>
    %43 = vector.shape_cast %40 : vector<8x16xf32> to vector<1x8x16xf32>
    tpu.vector_store %arg3[%c0_40, %c0_41, %c32_42], %43 {strides = array<i32>} : memref<1x8x256xf32, #tpu.memory_space<vmem>>, vector<1x8x16xf32>,
    %44 = vector.extract_strided_slice %31 {offsets = [0, 54], sizes = [8, 16], strides = [1, 1]} : vector<8x384xf32> to vector<8x16xf32>
    %c0_43 = arith.constant 0 : index
    %c0_44 = arith.constant 0 : index
    %c48 = arith.constant 48 : index
    %45 = vector.load %arg3[%c0_43, %c0_44, %c48] : memref<1x8x256xf32, #tpu.memory_space<vmem>>, vector<1x8x16xf32>
    %46 = vector.shape_cast %45 : vector<1x8x16xf32> to vector<8x16xf32>
    %47 = vector.shape_cast %44 : vector<8x16xf32> to vector<1x8x16xf32>
    tpu.vector_store %arg3[%c0_43, %c0_44, %c48], %47 {strides = array<i32>} : memref<1x8x256xf32, #tpu.memory_space<vmem>>, vector<1x8x16xf32>,
    %48 = vector.extract_strided_slice %31 {offsets = [0, 72], sizes = [8, 16], strides = [1, 1]} : vector<8x384xf32> to vector<8x16xf32>
    %c0_45 = arith.constant 0 : index
    %c0_46 = arith.constant 0 : index
    %c64 = arith.constant 64 : index
    %49 = vector.load %arg3[%c0_45, %c0_46, %c64] : memref<1x8x256xf32, #tpu.memory_space<vmem>>, vector<1x8x16xf32>
    %50 = vector.shape_cast %49 : vector<1x8x16xf32> to vector<8x16xf32>
    %51 = vector.shape_cast %48 : vector<8x16xf32> to vector<1x8x16xf32>
    tpu.vector_store %arg3[%c0_45, %c0_46, %c64], %51 {strides = array<i32>} : memref<1x8x256xf32, #tpu.memory_space<vmem>>, vector<1x8x16xf32>,
    %52 = vector.extract_strided_slice %31 {offsets = [0, 90], sizes = [8, 16], strides = [1, 1]} : vector<8x384xf32> to vector<8x16xf32>
    %c0_47 = arith.constant 0 : index
    %c0_48 = arith.constant 0 : index
    %c80 = arith.constant 80 : index
    %53 = vector.load %arg3[%c0_47, %c0_48, %c80] : memref<1x8x256xf32, #tpu.memory_space<vmem>>, vector<1x8x16xf32>
    %54 = vector.shape_cast %53 : vector<1x8x16xf32> to vector<8x16xf32>
    %55 = vector.shape_cast %52 : vector<8x16xf32> to vector<1x8x16xf32>
    tpu.vector_store %arg3[%c0_47, %c0_48, %c80], %55 {strides = array<i32>} : memref<1x8x256xf32, #tpu.memory_space<vmem>>, vector<1x8x16xf32>,
    %56 = vector.extract_strided_slice %31 {offsets = [0, 108], sizes = [8, 16], strides = [1, 1]} : vector<8x384xf32> to vector<8x16xf32>
    %c0_49 = arith.constant 0 : index
    %c0_50 = arith.constant 0 : index
    %c96 = arith.constant 96 : index
    %57 = vector.load %arg3[%c0_49, %c0_50, %c96] : memref<1x8x256xf32, #tpu.memory_space<vmem>>, vector<1x8x16xf32>
    %58 = vector.shape_cast %57 : vector<1x8x16xf32> to vector<8x16xf32>
    %59 = vector.shape_cast %56 : vector<8x16xf32> to vector<1x8x16xf32>
    tpu.vector_store %arg3[%c0_49, %c0_50, %c96], %59 {strides = array<i32>} : memref<1x8x256xf32, #tpu.memory_space<vmem>>, vector<1x8x16xf32>,
    %60 = vector.extract_strided_slice %31 {offsets = [0, 126], sizes = [8, 16], strides = [1, 1]} : vector<8x384xf32> to vector<8x16xf32>
    %c0_51 = arith.constant 0 : index
    %c0_52 = arith.constant 0 : index
    %c112 = arith.constant 112 : index
    %61 = vector.load %arg3[%c0_51, %c0_52, %c112] : memref<1x8x256xf32, #tpu.memory_space<vmem>>, vector<1x8x16xf32>
    %62 = vector.shape_cast %61 : vector<1x8x16xf32> to vector<8x16xf32>
    %63 = vector.shape_cast %60 : vector<8x16xf32> to vector<1x8x16xf32>
    tpu.vector_store %arg3[%c0_51, %c0_52, %c112], %63 {strides = array<i32>} : memref<1x8x256xf32, #tpu.memory_space<vmem>>, vector<1x8x16xf32>,
    %64 = vector.extract_strided_slice %31 {offsets = [0, 144], sizes = [8, 16], strides = [1, 1]} : vector<8x384xf32> to vector<8x16xf32>
    %c0_53 = arith.constant 0 : index
    %c0_54 = arith.constant 0 : index
    %c128 = arith.constant 128 : index
    %65 = vector.load %arg3[%c0_53, %c0_54, %c128] : memref<1x8x256xf32, #tpu.memory_space<vmem>>, vector<1x8x16xf32>
    %66 = vector.shape_cast %65 : vector<1x8x16xf32> to vector<8x16xf32>
    %67 = vector.shape_cast %64 : vector<8x16xf32> to vector<1x8x16xf32>
    tpu.vector_store %arg3[%c0_53, %c0_54, %c128], %67 {strides = array<i32>} : memref<1x8x256xf32, #tpu.memory_space<vmem>>, vector<1x8x16xf32>,
    %68 = vector.extract_strided_slice %31 {offsets = [0, 162], sizes = [8, 16], strides = [1, 1]} : vector<8x384xf32> to vector<8x16xf32>
    %c0_55 = arith.constant 0 : index
    %c0_56 = arith.constant 0 : index
    %c144 = arith.constant 144 : index
    %69 = vector.load %arg3[%c0_55, %c0_56, %c144] : memref<1x8x256xf32, #tpu.memory_space<vmem>>, vector<1x8x16xf32>
    %70 = vector.shape_cast %69 : vector<1x8x16xf32> to vector<8x16xf32>
    %71 = vector.shape_cast %68 : vector<8x16xf32> to vector<1x8x16xf32>
    tpu.vector_store %arg3[%c0_55, %c0_56, %c144], %71 {strides = array<i32>} : memref<1x8x256xf32, #tpu.memory_space<vmem>>, vector<1x8x16xf32>,
    %72 = vector.extract_strided_slice %31 {offsets = [0, 180], sizes = [8, 16], strides = [1, 1]} : vector<8x384xf32> to vector<8x16xf32>
    %c0_57 = arith.constant 0 : index
    %c0_58 = arith.constant 0 : index
    %c160 = arith.constant 160 : index
    %73 = vector.load %arg3[%c0_57, %c0_58, %c160] : memref<1x8x256xf32, #tpu.memory_space<vmem>>, vector<1x8x16xf32>
    %74 = vector.shape_cast %73 : vector<1x8x16xf32> to vector<8x16xf32>
    %75 = vector.shape_cast %72 : vector<8x16xf32> to vector<1x8x16xf32>
    tpu.vector_store %arg3[%c0_57, %c0_58, %c160], %75 {strides = array<i32>} : memref<1x8x256xf32, #tpu.memory_space<vmem>>, vector<1x8x16xf32>,
    %76 = vector.extract_strided_slice %31 {offsets = [0, 198], sizes = [8, 16], strides = [1, 1]} : vector<8x384xf32> to vector<8x16xf32>
    %c0_59 = arith.constant 0 : index
    %c0_60 = arith.constant 0 : index
    %c176 = arith.constant 176 : index
    %77 = vector.load %arg3[%c0_59, %c0_60, %c176] : memref<1x8x256xf32, #tpu.memory_space<vmem>>, vector<1x8x16xf32>
    %78 = vector.shape_cast %77 : vector<1x8x16xf32> to vector<8x16xf32>
    %79 = vector.shape_cast %76 : vector<8x16xf32> to vector<1x8x16xf32>
    tpu.vector_store %arg3[%c0_59, %c0_60, %c176], %79 {strides = array<i32>} : memref<1x8x256xf32, #tpu.memory_space<vmem>>, vector<1x8x16xf32>,
    %80 = vector.extract_strided_slice %31 {offsets = [0, 216], sizes = [8, 16], strides = [1, 1]} : vector<8x384xf32> to vector<8x16xf32>
    %c0_61 = arith.constant 0 : index
    %c0_62 = arith.constant 0 : index
    %c192 = arith.constant 192 : index
    %81 = vector.load %arg3[%c0_61, %c0_62, %c192] : memref<1x8x256xf32, #tpu.memory_space<vmem>>, vector<1x8x16xf32>
    %82 = vector.shape_cast %81 : vector<1x8x16xf32> to vector<8x16xf32>
    %83 = vector.shape_cast %80 : vector<8x16xf32> to vector<1x8x16xf32>
    tpu.vector_store %arg3[%c0_61, %c0_62, %c192], %83 {strides = array<i32>} : memref<1x8x256xf32, #tpu.memory_space<vmem>>, vector<1x8x16xf32>,
    %84 = vector.extract_strided_slice %31 {offsets = [0, 234], sizes = [8, 16], strides = [1, 1]} : vector<8x384xf32> to vector<8x16xf32>
    %c0_63 = arith.constant 0 : index
    %c0_64 = arith.constant 0 : index
    %c208 = arith.constant 208 : index
    %85 = vector.load %arg3[%c0_63, %c0_64, %c208] : memref<1x8x256xf32, #tpu.memory_space<vmem>>, vector<1x8x16xf32>
    %86 = vector.shape_cast %85 : vector<1x8x16xf32> to vector<8x16xf32>
    %87 = vector.shape_cast %84 : vector<8x16xf32> to vector<1x8x16xf32>
    tpu.vector_store %arg3[%c0_63, %c0_64, %c208], %87 {strides = array<i32>} : memref<1x8x256xf32, #tpu.memory_space<vmem>>, vector<1x8x16xf32>,
    %88 = vector.extract_strided_slice %31 {offsets = [0, 252], sizes = [8, 16], strides = [1, 1]} : vector<8x384xf32> to vector<8x16xf32>
    %c0_65 = arith.constant 0 : index
    %c0_66 = arith.constant 0 : index
    %c224 = arith.constant 224 : index
    %89 = vector.load %arg3[%c0_65, %c0_66, %c224] : memref<1x8x256xf32, #tpu.memory_space<vmem>>, vector<1x8x16xf32>
    %90 = vector.shape_cast %89 : vector<1x8x16xf32> to vector<8x16xf32>
    %91 = vector.shape_cast %88 : vector<8x16xf32> to vector<1x8x16xf32>
    tpu.vector_store %arg3[%c0_65, %c0_66, %c224], %91 {strides = array<i32>} : memref<1x8x256xf32, #tpu.memory_space<vmem>>, vector<1x8x16xf32>,
    %92 = vector.extract_strided_slice %31 {offsets = [0, 270], sizes = [8, 16], strides = [1, 1]} : vector<8x384xf32> to vector<8x16xf32>
    %c0_67 = arith.constant 0 : index
    %c0_68 = arith.constant 0 : index
    %c240 = arith.constant 240 : index
    %93 = vector.load %arg3[%c0_67, %c0_68, %c240] : memref<1x8x256xf32, #tpu.memory_space<vmem>>, vector<1x8x16xf32>
    %94 = vector.shape_cast %93 : vector<1x8x16xf32> to vector<8x16xf32>
    %95 = vector.shape_cast %92 : vector<8x16xf32> to vector<1x8x16xf32>
    tpu.vector_store %arg3[%c0_67, %c0_68, %c240], %95 {strides = array<i32>} : memref<1x8x256xf32, #tpu.memory_space<vmem>>, vector<1x8x16xf32>,
    return
  }
  func.func @transform_0(%arg0: i32) -> (i32, i32, i32) {
    %c0_i32 = arith.constant 0 : i32
    %c0_i32_0 = arith.constant 0 : i32
    %c0_i32_1 = arith.constant 0 : i32
    return %arg0, %c0_i32, %c0_i32_0 : i32, i32, i32
  }
  func.func @transform_1(%arg0: i32) -> (i32, i32) {
    %c0_i32 = arith.constant 0 : i32
    %c0_i32_0 = arith.constant 0 : i32
    %c0_i32_1 = arith.constant 0 : i32
    return %c0_i32, %c0_i32_0 : i32, i32
  }
  func.func @transform_2(%arg0: i32) -> (i32, i32, i32) {
    %c0_i32 = arith.constant 0 : i32
    %c0_i32_0 = arith.constant 0 : i32
    %c0_i32_1 = arith.constant 0 : i32
    return %arg0, %c0_i32, %c0_i32_0 : i32, i32, i32
  }
}

</mosaic_0001>

<llo_original>
// kernel: tpu_custom_call.1
$region0: #{tpu_custom_call.1}
  #allocation0 [shape = 'u32[]', space=smem, size = 0x4, offset = 0x4, fixed_abs, tag = 'smem constant byte address 0x4 - core index']
  #allocation1 [shape = 'u32[144,128]{1,0:T(1,128)}', space=vmem, size = 0x12000, scoped, tag = 'internal scratch']
  #allocation2 [shape = 'bf16[36,384]{1,0:T(8,128)(2,1)}', space=vmem, size = 0x7800, scoped, tag = 'scratch operand']
  %s0 = inlined_call_operand.hbm [shape: bf16[2,4,432], index: 0, kind: input, shape index: {}]
  %s1 = inlined_call_operand.hbm [shape: bf16[8,36], index: 1, kind: input, shape index: {}]
  %s2 = inlined_call_operand.hbm [shape: f32[2,8,256], index: 2, kind: output, shape index: {}]
  %s3 = sld [smem:[#allocation0]]
  $region49: #{tpu_custom_call.1} parent=0
    _
  %s5 = ssub.s32 1, %s3
  %s6 = scalar_select 0, %s5, %s3
  $region1: #{tpu_custom_call.1} parent=0
    #allocation3 [shape = 'u8[8192]{0}', space=vmem, size = 0x2000, scoped, tag = 'input window, operand 0']
    #allocation4 [shape = 's32[2]{0}', space=sflag, size = 0x8, scoped, tag = 'scoped memory for tpu_custom_call.1']
    #allocation5 [shape = 's32[2]{0}', space=sflag, size = 0x8, scoped, tag = 'scoped memory for tpu_custom_call.1']
    #allocation6 [shape = 'u8[2048]{0}', space=vmem, size = 0x800, scoped, tag = 'input window, operand 1, single buffered']
    #allocation7 [shape = 's32[1]{0}', space=sflag, size = 0x4, scoped, tag = 'scoped memory for tpu_custom_call.1']
    #allocation8 [shape = 'u8[16384]{0}', space=vmem, size = 0x4000, scoped, tag = 'output window, operand 0']
    %7 = vsyncpa [#allocation4], 0
    %s8 = scalar_lea.sflag [#allocation4], 1
    %9 = vsyncpa %s8, 0
    %10 = vsyncpa [#allocation7], 0
    %11 = vsyncpa [#allocation5], 0
    %s12 = scalar_lea.sflag [#allocation5], 1
    %13 = vsyncpa %s12, 0
    loop: start=0, step=1, limit=4
    $region2: #{tpu_custom_call.1} parent=1 // loop_pre_header
      _
    $region3: #{tpu_custom_call.1} parent=1 // loop_header
      %s15 = sphi 0, %s19
      %p16 = scmp.ge.s32.totalorder %s15, 4
      %s25 = sphi 0, %s27
      %s28 = sphi 0, %s25
      %s29 = sphi 0, %s28
      %s45 = sphi 0, %s29
      %s49 = sphi 0, %s49
      %s51 = sphi 0, %s49
      %s52 = sphi 0, %s51
      %s66 = sphi 0, %s52
      %s72 = sphi 0, %s74
      %s75 = sphi 0, %s72
      %s76 = sphi 0, %s75
      %s92 = sphi 0, %s76
    $region4: #{tpu_custom_call.1} parent=1 // loop_header_branch
      %18 = sbr.rel (%p16) target = $region8
    $region5: #{tpu_custom_call.1} parent=1 // loop_body
      %s20 = ssub.s32 %s15, 1
      %s21 = ssub.s32 %s15, 2
      %s22 = sadd.s32 %s15, 1
      %s23 = ssub.s32 %s15, %s22
      %p24 = scmp.eq.s32.totalorder %s23, 0
      %s26 = sadd.s32 %s25, 1
      %s27 = scalar_select %p24, %s25, %s26
      %p30 = pneg %p24
      %p31 = scmp.eq.s32.totalorder %s15, 1
      %p32 = por %p30, %p31
      %p33 = scmp.ne.s32.totalorder %s25, %s28
      %p34 = scmp.eq.s32.totalorder %s15, 0
      %p35 = por %p33, %p34
      %p36 = scmp.ne.s32.totalorder %s25, %s28
      %p37 = scmp.eq.s32.totalorder %s20, 1
      %p38 = por %p36, %p37
      %p39 = scmp.ne.s32.totalorder %s28, %s29
      %p40 = scmp.eq.s32.totalorder %s20, 0
      %p41 = por %p39, %p40
      %p42 = scmp.ne.s32.totalorder %s28, %s29
      %p43 = scmp.eq.s32.totalorder %s21, 1
      %p44 = por %p42, %p43
      %p46 = scmp.ne.s32.totalorder %s29, %s45
      %p47 = scmp.eq.s32.totalorder %s21, 0
      %p48 = por %p46, %p47
      %s50 = sadd.s32 %s49, 1
      %p53 = scmp.eq.s32.totalorder %s15, 1
      %p54 = scmp.ne.s32.totalorder %s49, %s51
      %p55 = scmp.eq.s32.totalorder %s15, 0
      %p56 = por %p54, %p55
      %p57 = scmp.ne.s32.totalorder %s49, %s51
      %p58 = scmp.eq.s32.totalorder %s20, 1
      %p59 = por %p57, %p58
      %p60 = scmp.ne.s32.totalorder %s51, %s52
      %p61 = scmp.eq.s32.totalorder %s20, 0
      %p62 = por %p60, %p61
      %p63 = scmp.ne.s32.totalorder %s51, %s52
      %p64 = scmp.eq.s32.totalorder %s21, 1
      %p65 = por %p63, %p64
      %p67 = scmp.ne.s32.totalorder %s52, %s66
      %p68 = scmp.eq.s32.totalorder %s21, 0
      %p69 = por %p67, %p68
      %s70 = ssub.s32 %s15, %s22
      %p71 = scmp.eq.s32.totalorder %s70, 0
      %s73 = sadd.s32 %s72, 1
      %s74 = scalar_select %p71, %s72, %s73
      %p77 = pneg %p71
      %p78 = scmp.eq.s32.totalorder %s15, 1
      %p79 = por %p77, %p78
      %p80 = scmp.ne.s32.totalorder %s72, %s75
      %p81 = scmp.eq.s32.totalorder %s15, 0
      %p82 = por %p80, %p81
      %p83 = scmp.ne.s32.totalorder %s72, %s75
      %p84 = scmp.eq.s32.totalorder %s20, 1
      %p85 = por %p83, %p84
      %p86 = scmp.ne.s32.totalorder %s75, %s76
      %p87 = scmp.eq.s32.totalorder %s20, 0
      %p88 = por %p86, %p87
      %p89 = scmp.ne.s32.totalorder %s75, %s76
      %p90 = scmp.eq.s32.totalorder %s21, 1
      %p91 = por %p89, %p90
      %p93 = scmp.ne.s32.totalorder %s76, %s92
      %p94 = scmp.eq.s32.totalorder %s21, 0
      %p95 = por %p93, %p94
      %p96 = scmp.le.s32.totalorder 1, %s15
      %p97 = scmp.lt.s32.totalorder %s15, 3
      %p98 = pnand %p96, %p97
      %p99 = pneg %p98
      // Predicated region
      $region9: #{tpu_custom_call.1} parent=5 // pred_check
        _
      $region10: #{tpu_custom_call.1} parent=5 // pred_check_branch
        %101 = sbr.rel (%p98) target = $region12
      $region11: #{tpu_custom_call.1} parent=5 // pred_region
        %s102 = ssub.s32 %s15, 1
        // Predicated region
        $region13: #{tpu_custom_call.1} parent=11 // pred_check
          %p103 = pneg %p62
        $region14: #{tpu_custom_call.1} parent=11 // pred_check_branch
          %105 = sbr.rel (%p103) target = $region16
        $region15: #{tpu_custom_call.1} parent=11 // pred_region
          %s107 = ssub.s32 64, 64
          %108 = vsyncadd [#allocation7], %s107
          %s110 = sshll.u32 [#allocation6], 4
          %s111 = int_to_ptr.vmem [resolvable:$true] %s110
          %113 = dma.hbm_to_vmem [thread:$0]  %s1, 64, %s111, [#allocation7]
        $region16: #{tpu_custom_call.1} parent=11 // pred_fallthru
          _
      $region12: #{tpu_custom_call.1} parent=5 // pred_fallthru
        _
      %p114 = scmp.lt.s32.totalorder %s15, 2
      // Predicated region
      $region17: #{tpu_custom_call.1} parent=5 // pred_check
        %p115 = pneg %p114
      $region18: #{tpu_custom_call.1} parent=5 // pred_check_branch
        %117 = sbr.rel (%p115) target = $region20
      $region19: #{tpu_custom_call.1} parent=5 // pred_region
        // Predicated region
        $region21: #{tpu_custom_call.1} parent=19 // pred_check
          %p118 = pneg %p35
        $region22: #{tpu_custom_call.1} parent=19 // pred_check_branch
          %120 = sbr.rel (%p118) target = $region24
        $region23: #{tpu_custom_call.1} parent=19 // pred_region
          %s121 = sand.u32 %s25, 1
          %s122 = scalar_lea.sflag [#allocation4], %s121
          %s123 = sand.u32 %s25, 1
          %s124 = smul.addr %s123, 8
          %s125 = scalar_lea.vmem [#allocation3], %s124
          %s127 = ssub.s32 128, 128
          %128 = vsyncadd %s122, %s127
          %s129 = smul.addr %s15, 4
          %s130 = smul.addr %s129, 32
          %s131 = scalar_lea.hbm %s0, %s130
          %s133 = sshll.u32 %s125, 4
          %s134 = int_to_ptr.vmem [resolvable:$true] %s133
          %136 = dma.hbm_to_vmem [thread:$0]  %s131, 128, %s134, %s122
        $region24: #{tpu_custom_call.1} parent=19 // pred_fallthru
          _
      $region20: #{tpu_custom_call.1} parent=5 // pred_fallthru
        _
      %p137 = scmp.le.s32.totalorder 1, %s15
      %p138 = scmp.lt.s32.totalorder %s15, 3
      %p139 = pnand %p137, %p138
      %p140 = pneg %p139
      // Predicated region
      $region25: #{tpu_custom_call.1} parent=5 // pred_check
        _
      $region26: #{tpu_custom_call.1} parent=5 // pred_check_branch
        %142 = sbr.rel (%p139) target = $region28
      $region27: #{tpu_custom_call.1} parent=5 // pred_region
        %s143 = ssub.s32 %s15, 1
        %s144 = sand.u32 %s28, 1
        %s145 = scalar_lea.sflag [#allocation4], %s144
        %s146 = sand.u32 %s28, 1
        %s147 = smul.addr %s146, 8
        %s148 = scalar_lea.vmem [#allocation3], %s147
        // Predicated region
        $region29: #{tpu_custom_call.1} parent=27 // pred_check
          %p149 = pneg %p41
        $region30: #{tpu_custom_call.1} parent=27 // pred_check_branch
          %151 = sbr.rel (%p149) target = $region32
        $region31: #{tpu_custom_call.1} parent=27 // pred_region
          %152 = dma.done %s145, 128
        $region32: #{tpu_custom_call.1} parent=27 // pred_fallthru
          _
        // Predicated region
        $region33: #{tpu_custom_call.1} parent=27 // pred_check
          %p153 = pneg %p62
        $region34: #{tpu_custom_call.1} parent=27 // pred_check_branch
          %155 = sbr.rel (%p153) target = $region36
        $region35: #{tpu_custom_call.1} parent=27 // pred_region
          %156 = dma.done [#allocation7], 64
        $region36: #{tpu_custom_call.1} parent=27 // pred_fallthru
          _
        %s157 = sand.u32 %s28, 1
        %s158 = scalar_lea.sflag [#allocation4], %s157
        %s159 = sand.u32 %s28, 1
        %s160 = smul.addr %s159, 8
        %s161 = scalar_lea.vmem [#allocation3], %s160
        %p162 = pneg %p41
        %p163 = pneg %p38
        %p164 = pneg %p62
        %p165 = pneg %p59
        %p166 = pneg %p88
        %p167 = pneg %p85
        %s168 = sand.u32 %s75, 1
        %s169 = scalar_lea.sflag [#allocation5], %s168
        %s170 = sand.u32 %s75, 1
        %s171 = smul.addr %s170, 16
        %s172 = scalar_lea.vmem [#allocation8], %s171
        %v174 = vld [vmem:[%s148] sm:$0x3f]
        %v176 = vcombine.high %v174, %v174
        %v178 = vunpack.c.l.s4 1983009808
        %v179 = vunpack.c.0.s8 %v178
        %v180 = vlaneseq
        %v181 = vshrl.u32 %v180, 7
        %v182 = vsub.s32 %v179, %v181
        %v183 = vrot.slane %v174, %v182
        %v185 = vunpack.c.l.s4 1983009808
        %v186 = vunpack.c.0.s8 %v185
        %v187 = vlaneseq
        %v188 = vshrl.u32 %v187, 7
        %v189 = vsub.s32 %v186, %v188
        %v190 = vrot.slane %v176, %v189
        %193 = vst [vmem:[#allocation2] sm:$0x33] %v183
        %194 = vst [vmem:[#allocation2 + $0x8] sm:$0x3] %v190
        %v195 = vld [vmem:[%s148] sm:$0xff]
        %v197 = vcombine.low %v195, %v195
        %v199 = vunpack.c.l.s4 1983009808
        %v200 = vunpack.c.0.s8 %v199
        %v201 = vlaneseq
        %v202 = vshrl.u32 %v201, 7
        %v203 = vsub.s32 %v200, %v202
        %v204 = vrot.slane %v197, %v203
        %v206 = vunpack.c.l.s4 1983009808
        %v207 = vunpack.c.0.s8 %v206
        %v208 = vlaneseq
        %v209 = vshrl.u32 %v208, 7
        %v210 = vsub.s32 %v207, %v209
        %v211 = vrot.slane %v195, %v210
        %212 = vrot.lane.b32.xlu0 %v204, 127
        %v213 = vpop.permute.xlu0 %212
        %214 = vrot.lane.b32.xlu0 %v211, 127
        %v215 = vpop.permute.xlu0 %214
        %v216 = vrot.slane %v213, 4
        %v217 = vrot.slane %v215, 4
        %vm218 = vcmask 1043456
        %v219 = vsel %vm218, %v216, %v217
        %vm220 = vcmask 1039360
        %v221 = vsel %vm220, %v213, %v219
        %v222 = vsel %vm220, %v215, %v217
        %225 = vst [vmem:[#allocation2] sm:$0xcc] %v221
        %226 = vst [vmem:[#allocation2 + $0x8] sm:$0xc] %v222
        %v227 = vld [vmem:[%s148] sm:$0xff]
        %v229 = vcombine.high %v227, %v227
        %v231 = vunpack.c.l.s4 1983009808
        %v232 = vunpack.c.0.s8 %v231
        %v233 = vlaneseq
        %v234 = vshrl.u32 %v233, 7
        %v235 = vsub.s32 %v232, %v234
        %v236 = vrot.slane %v227, %v235
        %v238 = vunpack.c.l.s4 1983009808
        %v239 = vunpack.c.0.s8 %v238
        %v240 = vlaneseq
        %v241 = vshrl.u32 %v240, 7
        %v242 = vsub.s32 %v239, %v241
        %v243 = vrot.slane %v229, %v242
        %244 = vrot.lane.b32.xlu0 %v236, 126
        %v245 = vpop.permute.xlu0 %244
        %246 = vrot.lane.b32.xlu0 %v243, 126
        %v247 = vpop.permute.xlu0 %246
        %v248 = vrot.slane %v245, 4
        %v249 = vrot.slane %v247, 4
        %v250 = vsel %vm218, %v248, %v249
        %vm251 = vcmask 1031168
        %v252 = vsel %vm251, %v245, %v250
        %v253 = vsel %vm251, %v247, %v249
        %256 = vst [vmem:[#allocation2 + $0xc] sm:$0x33] %v252
        %257 = vst [vmem:[#allocation2 + $0x14] sm:$0x3] %v253
        %v258 = vld [vmem:[%s148] sm:$0xff]
        %v260 = vcombine.low %v258, %v258
        %v262 = vunpack.c.l.s4 1983009808
        %v263 = vunpack.c.0.s8 %v262
        %v264 = vlaneseq
        %v265 = vshrl.u32 %v264, 7
        %v266 = vsub.s32 %v263, %v265
        %v267 = vrot.slane %v260, %v266
        %v269 = vunpack.c.l.s4 1983009808
        %v270 = vunpack.c.0.s8 %v269
        %v271 = vlaneseq
        %v272 = vshrl.u32 %v271, 7
        %v273 = vsub.s32 %v270, %v272
        %v274 = vrot.slane %v258, %v273
        %275 = vrot.lane.b32.xlu0 %v267, 110
        %v276 = vpop.permute.xlu0 %275
        %277 = vrot.lane.b32.xlu0 %v274, 110
        %v278 = vpop.permute.xlu0 %277
        %v279 = vrot.slane %v276, 4
        %v280 = vrot.slane %v278, 4
        %v281 = vsel %vm218, %v279, %v280
        %vm282 = vcmask 900096
        %v283 = vsel %vm282, %v276, %v281
        %v284 = vsel %vm282, %v278, %v280
        %287 = vst [vmem:[#allocation2 + $0xc] sm:$0xcc] %v283
        %288 = vst [vmem:[#allocation2 + $0x14] sm:$0xc] %v284
        %v289 = vld [vmem:[%s148] sm:$0xff]
        %v291 = vcombine.high %v289, %v289
        %v293 = vunpack.c.l.s4 1983009808
        %v294 = vunpack.c.0.s8 %v293
        %v295 = vlaneseq
        %v296 = vshrl.u32 %v295, 7
        %v297 = vsub.s32 %v294, %v296
        %v298 = vrot.slane %v289, %v297
        %v300 = vunpack.c.l.s4 1983009808
        %v301 = vunpack.c.0.s8 %v300
        %v302 = vlaneseq
        %v303 = vshrl.u32 %v302, 7
        %v304 = vsub.s32 %v301, %v303
        %v305 = vrot.slane %v291, %v304
        %306 = vrot.lane.b32.xlu0 %v298, 109
        %v307 = vpop.permute.xlu0 %306
        %308 = vrot.lane.b32.xlu0 %v305, 109
        %v309 = vpop.permute.xlu0 %308
        %v310 = vrot.slane %v307, 4
        %v311 = vrot.slane %v309, 4
        %v312 = vsel %vm218, %v310, %v311
        %vm313 = vcmask 891904
        %v314 = vsel %vm313, %v307, %v312
        %v315 = vsel %vm313, %v309, %v311
        %318 = vst [vmem:[#allocation2 + $0x18] sm:$0x33] %v314
        %319 = vst [vmem:[#allocation2 + $0x20] sm:$0x3] %v315
        %v320 = vld [vmem:[%s148] sm:$0xff]
        %v322 = vcombine.low %v320, %v320
        %v324 = vunpack.c.l.s4 1983009808
        %v325 = vunpack.c.0.s8 %v324
        %v326 = vlaneseq
        %v327 = vshrl.u32 %v326, 7
        %v328 = vsub.s32 %v325, %v327
        %v329 = vrot.slane %v322, %v328
        %v331 = vunpack.c.l.s4 1983009808
        %v332 = vunpack.c.0.s8 %v331
        %v333 = vlaneseq
        %v334 = vshrl.u32 %v333, 7
        %v335 = vsub.s32 %v332, %v334
        %v336 = vrot.slane %v320, %v335
        %337 = vrot.lane.b32.xlu0 %v329, 108
        %v338 = vpop.permute.xlu0 %337
        %339 = vrot.lane.b32.xlu0 %v336, 108
        %v340 = vpop.permute.xlu0 %339
        %v341 = vrot.slane %v338, 4
        %v342 = vrot.slane %v340, 4
        %v343 = vsel %vm218, %v341, %v342
        %vm344 = vcmask 883712
        %v345 = vsel %vm344, %v338, %v343
        %v346 = vsel %vm344, %v340, %v342
        %349 = vst [vmem:[#allocation2 + $0x18] sm:$0xcc] %v345
        %350 = vst [vmem:[#allocation2 + $0x20] sm:$0xc] %v346
        %v351 = vld [vmem:[%s148] sm:$0xff]
        %v353 = vcombine.high %v351, %v351
        %v355 = vunpack.c.l.s4 1983009808
        %v356 = vunpack.c.0.s8 %v355
        %v357 = vlaneseq
        %v358 = vshrl.u32 %v357, 7
        %v359 = vsub.s32 %v356, %v358
        %v360 = vrot.slane %v351, %v359
        %v362 = vunpack.c.l.s4 1983009808
        %v363 = vunpack.c.0.s8 %v362
        %v364 = vlaneseq
        %v365 = vshrl.u32 %v364, 7
        %v366 = vsub.s32 %v363, %v365
        %v367 = vrot.slane %v353, %v366
        %368 = vrot.lane.b32.xlu0 %v360, 92
        %v369 = vpop.permute.xlu0 %368
        %370 = vrot.lane.b32.xlu0 %v367, 92
        %v371 = vpop.permute.xlu0 %370
        %v372 = vrot.slane %v369, 4
        %v373 = vrot.slane %v371, 4
        %v374 = vsel %vm218, %v372, %v373
        %vm375 = vcmask 752640
        %v376 = vsel %vm375, %v369, %v374
        %v377 = vsel %vm375, %v371, %v373
        %380 = vst [vmem:[#allocation2 + $0x24] sm:$0x33] %v376
        %381 = vst [vmem:[#allocation2 + $0x2c] sm:$0x3] %v377
        %v382 = vld [vmem:[%s148] sm:$0xff]
        %v384 = vcombine.low %v382, %v382
        %v386 = vunpack.c.l.s4 1983009808
        %v387 = vunpack.c.0.s8 %v386
        %v388 = vlaneseq
        %v389 = vshrl.u32 %v388, 7
        %v390 = vsub.s32 %v387, %v389
        %v391 = vrot.slane %v384, %v390
        %v393 = vunpack.c.l.s4 1983009808
        %v394 = vunpack.c.0.s8 %v393
        %v395 = vlaneseq
        %v396 = vshrl.u32 %v395, 7
        %v397 = vsub.s32 %v394, %v396
        %v398 = vrot.slane %v382, %v397
        %399 = vrot.lane.b32.xlu0 %v391, 91
        %v400 = vpop.permute.xlu0 %399
        %401 = vrot.lane.b32.xlu0 %v398, 91
        %v402 = vpop.permute.xlu0 %401
        %v403 = vrot.slane %v400, 4
        %v404 = vrot.slane %v402, 4
        %v405 = vsel %vm218, %v403, %v404
        %vm406 = vcmask 744448
        %v407 = vsel %vm406, %v400, %v405
        %v408 = vsel %vm406, %v402, %v404
        %411 = vst [vmem:[#allocation2 + $0x24] sm:$0xcc] %v407
        %412 = vst [vmem:[#allocation2 + $0x2c] sm:$0xc] %v408
        %v413 = vld [vmem:[%s148] sm:$0xff]
        %v415 = vcombine.high %v413, %v413
        %v417 = vunpack.c.l.s4 1983009808
        %v418 = vunpack.c.0.s8 %v417
        %v419 = vlaneseq
        %v420 = vshrl.u32 %v419, 7
        %v421 = vsub.s32 %v418, %v420
        %v422 = vrot.slane %v413, %v421
        %v424 = vunpack.c.l.s4 1983009808
        %v425 = vunpack.c.0.s8 %v424
        %v426 = vlaneseq
        %v427 = vshrl.u32 %v426, 7
        %v428 = vsub.s32 %v425, %v427
        %v429 = vrot.slane %v415, %v428
        %430 = vrot.lane.b32.xlu0 %v422, 90
        %v431 = vpop.permute.xlu0 %430
        %432 = vrot.lane.b32.xlu0 %v429, 90
        %v433 = vpop.permute.xlu0 %432
        %v434 = vrot.slane %v431, 4
        %v435 = vrot.slane %v433, 4
        %v436 = vsel %vm218, %v434, %v435
        %vm437 = vcmask 736256
        %v438 = vsel %vm437, %v431, %v436
        %v439 = vsel %vm437, %v433, %v435
        %442 = vst [vmem:[#allocation2 + $0x30] sm:$0x33] %v438
        %443 = vst [vmem:[#allocation2 + $0x38] sm:$0x3] %v439
        %v444 = vld [vmem:[#allocation6] sm:$0xf]
        %v445 = vld [vmem:[#allocation2] sm:$0xff]
        %v446 = vld [vmem:[#allocation2 + $0x8] sm:$0xf]
        %v447 = vld [vmem:[#allocation2 + $0xc] sm:$0xff]
        %v448 = vld [vmem:[#allocation2 + $0x14] sm:$0xf]
        %v449 = vld [vmem:[#allocation2 + $0x18] sm:$0xff]
        %v450 = vld [vmem:[#allocation2 + $0x20] sm:$0xf]
        %v451 = vld [vmem:[#allocation2 + $0x24] sm:$0xff]
        %v452 = vld [vmem:[#allocation2 + $0x2c] sm:$0xf]
        %v453 = vld [vmem:[#allocation2 + $0x30] sm:$0x33]
        %v454 = vld [vmem:[#allocation2 + $0x38] sm:$0x3]
        %v465 = vunpack.c.l.b16 %v445
        %v466 = vunpack.c.h.b16 %v445
        %v467 = vunpack.c.l.b16 %v446
        %v468 = vunpack.c.l.b16 %v447
        %v469 = vunpack.c.h.b16 %v447
        %v470 = vunpack.c.l.b16 %v448
        %v471 = vunpack.c.l.b16 %v449
        %v472 = vunpack.c.h.b16 %v449
        %v473 = vunpack.c.l.b16 %v450
        %v474 = vunpack.c.l.b16 %v451
        %v475 = vunpack.c.h.b16 %v451
        %v476 = vunpack.c.l.b16 %v452
        %v477 = vunpack.c.l.b16 %v453
        %v478 = vunpack.c.h.b16 %v453
        %v479 = vunpack.c.l.b16 %v454
        %v480 = vpack.c.b16 %v468, %v465
        %v481 = vpack.c.b16 %v469, %v466
        %v482 = vpack.c.b16 %v470, %v467
        %v483 = vpack.c.b16 %v474, %v471
        %v484 = vpack.c.b16 %v475, %v472
        %v485 = vpack.c.b16 %v476, %v473
        %v486 = vpack.c.b16 %v477, %v477
        %v487 = vpack.c.b16 %v478, %v478
        %v488 = vpack.c.b16 %v479, %v479
        %vm495 = vcmask 293888
        %v497 = vsel %vm495, %v444, 0
        %vm499 = vcmask 1041408
        %v501 = vsel %vm499, %v486, 0
        %v504 = vsel %vm499, %v487, 0
        %v507 = vsel %vm499, %v488, 0
        %509 = vmatprep.subr.bf16.mxu0 %v481
        %510 = vmatpush1.bf16.msra.mxu0 %v480
        %511 = vmatprep.subr.bf16.mxu0 %v484
        %512 = vmatpush1.bf16.msra.mxu0 %v483
        %513 = vmatprep.subr.bf16.mxu0 %v504
        %514 = vmatpush1.bf16.msra.mxu0 %v501
        %515 = vmatprep.subr.bf16.mxu0 0
        %516 = vmatpush1.bf16.msra.mxu0 0
        %517 = vmatprep.subr.bf16.mxu0 0
        %518 = vmatpush1.bf16.msra.mxu0 0
        %519 = vmatprep.subr.bf16.mxu0 0
        %520 = vmatpush1.bf16.msra.mxu0 0
        %521 = vmatprep.subr.bf16.mxu0 0
        %522 = vmatpush1.bf16.msra.mxu0 0
        %523 = vmatprep.subr.bf16.mxu0 0
        %524 = vmatpush1.bf16.msra.mxu0 0
        %525 = vmatprep.subr.bf16.mxu0 0
        %526 = vmatpush1.bf16.msra.mxu0 0
        %527 = vmatprep.subr.bf16.mxu0 0
        %528 = vmatpush1.bf16.msra.mxu0 0
        %529 = vmatprep.subr.bf16.mxu0 0
        %530 = vmatpush1.bf16.msra.mxu0 0
        %531 = vmatprep.subr.bf16.mxu0 0
        %532 = vmatpush1.bf16.msra.mxu0 0
        %533 = vmatprep.subr.bf16.mxu0 0
        %534 = vmatpush1.bf16.msra.mxu0 0
        %535 = vmatprep.subr.bf16.mxu0 0
        %536 = vmatpush1.bf16.msra.mxu0 0
        %537 = vmatprep.subr.bf16.mxu0 0
        %538 = vmatpush1.bf16.msra.mxu0 0
        %539 = vmatprep.subr.bf16.mxu0 0
        %540 = vmatpush1.bf16.msra.mxu0 0
        %541 = vmatprep.mubr.bf16.mxu0 0
        %542 = vmatmul.mubr.bf16.gmra.mrb[0].mxu0 %v497
        %v543 = vpop.f32.mrb[0].mxu0
        %v544 = vadd.f32 0.0, %v543
        %v545 = vpop.f32.mrb[0].mxu0
        %v546 = vadd.f32 0.0, %v545
        %v547 = vpop.f32.mrb[0].mxu0
        %v548 = vpop.f32.mrb[0].mxu0
        %549 = vdwg.mxu0
        %550 = vmatprep.subr.bf16.mxu0 0
        %551 = vmatpush1.bf16.msra.mxu0 %v482
        %552 = vmatprep.subr.bf16.mxu0 0
        %553 = vmatpush1.bf16.msra.mxu0 %v485
        %554 = vmatprep.subr.bf16.mxu0 0
        %555 = vmatpush1.bf16.msra.mxu0 %v507
        %556 = vmatprep.subr.bf16.mxu0 0
        %557 = vmatpush1.bf16.msra.mxu0 0
        %558 = vmatprep.subr.bf16.mxu0 0
        %559 = vmatpush1.bf16.msra.mxu0 0
        %560 = vmatprep.subr.bf16.mxu0 0
        %561 = vmatpush1.bf16.msra.mxu0 0
        %562 = vmatprep.subr.bf16.mxu0 0
        %563 = vmatpush1.bf16.msra.mxu0 0
        %564 = vmatprep.subr.bf16.mxu0 0
        %565 = vmatpush1.bf16.msra.mxu0 0
        %566 = vmatprep.subr.bf16.mxu0 0
        %567 = vmatpush1.bf16.msra.mxu0 0
        %568 = vmatprep.subr.bf16.mxu0 0
        %569 = vmatpush1.bf16.msra.mxu0 0
        %570 = vmatprep.subr.bf16.mxu0 0
        %571 = vmatpush1.bf16.msra.mxu0 0
        %572 = vmatprep.subr.bf16.mxu0 0
        %573 = vmatpush1.bf16.msra.mxu0 0
        %574 = vmatprep.subr.bf16.mxu0 0
        %575 = vmatpush1.bf16.msra.mxu0 0
        %576 = vmatprep.subr.bf16.mxu0 0
        %577 = vmatpush1.bf16.msra.mxu0 0
        %578 = vmatprep.subr.bf16.mxu0 0
        %579 = vmatpush1.bf16.msra.mxu0 0
        %580 = vmatprep.subr.bf16.mxu0 0
        %581 = vmatpush1.bf16.msra.mxu0 0
        %582 = vmatprep.mubr.bf16.mxu0 0
        %583 = vmatmul.mubr.bf16.gmra.mrb[0].mxu0 %v497
        %v584 = vpop.f32.mrb[0].mxu0
        %v585 = vadd.f32 0.0, %v584
        %v586 = vpop.f32.mrb[0].mxu0
        %v587 = vpop.f32.mrb[0].mxu0
        %v588 = vpop.f32.mrb[0].mxu0
        %589 = vdwg.mxu0
        %v590 = vmax.f32 %v544, 0.0
        %v591 = vmax.f32 %v546, 0.0
        %v592 = vmax.f32 %v585, 0.0
        %vm593 = vcmask 130048
        %594 = vst.msk [vmem:[%s172] sm:$0xff] %vm593, %v590
        %596 = vrot.lane.b32.xlu0 %v590, 126
        %v597 = vpop.permute.xlu0 %596
        %vm599 = vcmask 261248
        %600 = vst.msk [vmem:[%s172] sm:$0xff] %vm599, %v597
        %601 = vrot.lane.b32.xlu0 %v590, 124
        %v602 = vpop.permute.xlu0 %601
        %vm604 = vcmask 392448
        %605 = vst.msk [vmem:[%s172] sm:$0xff] %vm604, %v602
        %606 = vrot.lane.b32.xlu0 %v590, 122
        %v607 = vpop.permute.xlu0 %606
        %vm609 = vcmask 523648
        %610 = vst.msk [vmem:[%s172] sm:$0xff] %vm609, %v607
        %611 = vrot.lane.b32.xlu0 %v590, 120
        %v612 = vpop.permute.xlu0 %611
        %vm614 = vcmask 654848
        %615 = vst.msk [vmem:[%s172] sm:$0xff] %vm614, %v612
        %616 = vrot.lane.b32.xlu0 %v590, 118
        %v617 = vpop.permute.xlu0 %616
        %vm619 = vcmask 786048
        %620 = vst.msk [vmem:[%s172] sm:$0xff] %vm619, %v617
        %621 = vrot.lane.b32.xlu0 %v590, 116
        %v622 = vpop.permute.xlu0 %621
        %vm624 = vcmask 917248
        %625 = vst.msk [vmem:[%s172] sm:$0xff] %vm624, %v622
        %627 = vrot.lane.b32.xlu0 %v590, 114
        %v628 = vpop.permute.xlu0 %627
        %629 = vrot.lane.b32.xlu0 %v591, 114
        %v630 = vpop.permute.xlu0 %629
        %vm631 = vcmask 932864
        %v632 = vsel %vm631, %v628, %v630
        %vm634 = vcmask 1048448
        %635 = vst.msk [vmem:[%s172] sm:$0xff] %vm634, %v632
        %636 = vrot.lane.b32.xlu0 %v591, 112
        %v637 = vpop.permute.xlu0 %636
        %639 = vst.msk [vmem:[%s172 + $0x8] sm:$0xff] %vm593, %v637
        %640 = vrot.lane.b32.xlu0 %v591, 110
        %v641 = vpop.permute.xlu0 %640
        %643 = vst.msk [vmem:[%s172 + $0x8] sm:$0xff] %vm599, %v641
        %644 = vrot.lane.b32.xlu0 %v591, 108
        %v645 = vpop.permute.xlu0 %644
        %647 = vst.msk [vmem:[%s172 + $0x8] sm:$0xff] %vm604, %v645
        %648 = vrot.lane.b32.xlu0 %v591, 106
        %v649 = vpop.permute.xlu0 %648
        %651 = vst.msk [vmem:[%s172 + $0x8] sm:$0xff] %vm609, %v649
        %652 = vrot.lane.b32.xlu0 %v591, 104
        %v653 = vpop.permute.xlu0 %652
        %655 = vst.msk [vmem:[%s172 + $0x8] sm:$0xff] %vm614, %v653
        %656 = vrot.lane.b32.xlu0 %v591, 102
        %v657 = vpop.permute.xlu0 %656
        %659 = vst.msk [vmem:[%s172 + $0x8] sm:$0xff] %vm619, %v657
        %661 = vrot.lane.b32.xlu0 %v591, 100
        %v662 = vpop.permute.xlu0 %661
        %663 = vrot.lane.b32.xlu0 %v592, 100
        %v664 = vpop.permute.xlu0 %663
        %vm665 = vcmask 818176
        %v666 = vsel %vm665, %v662, %v664
        %668 = vst.msk [vmem:[%s172 + $0x8] sm:$0xff] %vm624, %v666
        %669 = vrot.lane.b32.xlu0 %v592, 98
        %v670 = vpop.permute.xlu0 %669
        %672 = vst.msk [vmem:[%s172 + $0x8] sm:$0xff] %vm634, %v670
        %s673 = sand.u32 %s75, 1
        %s674 = scalar_lea.sflag [#allocation5], %s673
        %s675 = sand.u32 %s75, 1
        %s676 = smul.addr %s675, 16
        %s677 = scalar_lea.vmem [#allocation8], %s676
        // Predicated region
        $region37: #{tpu_custom_call.1} parent=27 // pred_check
          %p678 = pneg %p85
        $region38: #{tpu_custom_call.1} parent=27 // pred_check_branch
          %680 = sbr.rel (%p678) target = $region40
        $region39: #{tpu_custom_call.1} parent=27 // pred_region
          %s682 = ssub.s32 256, 256
          %683 = vsyncadd %s674, %s682
          %s684 = smul.addr %s20, 2
          %s685 = smul.addr %s684, 128
          %s686 = scalar_lea.hbm %s2, %s685
          %s688 = sshll.u32 %s677, 4
          %s689 = int_to_ptr.vmem [resolvable:$true] %s688
          %691 = dma.vmem_to_hbm [thread:$0]  %s689, 256, %s686, %s674
        $region40: #{tpu_custom_call.1} parent=27 // pred_fallthru
          _
      $region28: #{tpu_custom_call.1} parent=5 // pred_fallthru
        _
      %p692 = scmp.le.s32.totalorder 2, %s15
      // Predicated region
      $region41: #{tpu_custom_call.1} parent=5 // pred_check
        %p693 = pneg %p692
      $region42: #{tpu_custom_call.1} parent=5 // pred_check_branch
        %695 = sbr.rel (%p693) target = $region44
      $region43: #{tpu_custom_call.1} parent=5 // pred_region
        %s696 = ssub.s32 %s15, 2
        // Predicated region
        $region45: #{tpu_custom_call.1} parent=43 // pred_check
          %p697 = pneg %p91
        $region46: #{tpu_custom_call.1} parent=43 // pred_check_branch
          %699 = sbr.rel (%p697) target = $region48
        $region47: #{tpu_custom_call.1} parent=43 // pred_region
          %s700 = sand.u32 %s76, 1
          %s701 = scalar_lea.sflag [#allocation5], %s700
          %s702 = sand.u32 %s76, 1
          %s703 = smul.addr %s702, 16
          %s704 = scalar_lea.vmem [#allocation8], %s703
          %705 = dma.done %s701, 256
        $region48: #{tpu_custom_call.1} parent=43 // pred_fallthru
          _
      $region44: #{tpu_custom_call.1} parent=5 // pred_fallthru
        _
    $region6: #{tpu_custom_call.1} parent=1 // loop_footer
      %s19 = sadd.s32 1, %s15
    $region7: #{tpu_custom_call.1} parent=1 // loop_footer_branch
      %14 = sbr.rel target = $region3
    $region8: #{tpu_custom_call.1} parent=1 // loop_exit
      _
    %706 = vsyncpa [#allocation4], 1
    %s707 = scalar_lea.sflag [#allocation4], 1
    %708 = vsyncpa %s707, 1
    %709 = vsyncpa [#allocation7], 1
    %710 = vsyncpa [#allocation5], 1
    %s711 = scalar_lea.sflag [#allocation5], 1
    %712 = vsyncpa %s711, 1

</llo_original>
